<compile_context>
chip_gen: v7x
topology: tpu7x:2x2x1
jax: 0.10.0
libtpu: 0.0.40
codegen_flags: <defaults>
</compile_context>

<pallas_src>
import jax
import jax.numpy as jnp
import numpy as np
from jax.experimental import pallas as pl
from jax.experimental.pallas import tpu as pltpu


def _deconv_prod_relu_kernel(x_ref, w_ref, b_ref, y_ref, o_ref):
    # x_ref: [th*W, Cin]            input-pixel rows of this (n, row-tile)     (bf16)
    # w_ref: [Cin, 4*Cout]          deconv weight, lane order (kh, kw, c)      (bf16)
    # b_ref: [1, 4*Cout]            bias tiled over the 4 kernel positions     (f32)
    # y_ref: [1, th, 2, W, 2*Cout]  lateral map in its free NHWC reshape:
    #                               y_ref[0, i, kh, j, kw*C + c] = y[2i+kh, 2j+kw, c]
    # o_ref: [1, th, 2, W, 2*Cout]  output in the same layout (pure reshape back to NHWC)
    _, th, _, W, C2 = o_ref.shape            # C2 = 2*Cout
    acc = jnp.dot(x_ref[...], w_ref[...], preferred_element_type=jnp.float32)
    acc = acc + b_ref[...]                   # (th*W, 2*C2) f32
    for kh in range(2):                      # unrolled; C2 is a multiple of 128 -> lane-tile slice
        part = acc[:, kh * C2:(kh + 1) * C2].reshape(th, W, C2)   # row split only
        yk = y_ref[0, :, kh, :, :].astype(jnp.float32)
        o_ref[0, :, kh, :, :] = jnp.maximum(part * yk, 0.0).astype(o_ref.dtype)


def pack_deconv_weight(w):
    """PyTorch ConvTranspose2d weight [Cin, Cout, 2, 2] -> [Cin, 4*Cout], lanes (kh, kw, c)."""
    Cin, Cout = w.shape[0], w.shape[1]
    return jnp.transpose(w, (0, 2, 3, 1)).reshape(Cin, 4 * Cout)


def _pick_row_tile(N, H, W, target_rows, min_grid_steps):
    """Largest divisor th of H with th*W <= target_rows, shrunk to keep >= min_grid_steps."""
    divs = [d for d in range(1, H + 1) if H % d == 0]
    fits = [d for d in divs if d * W <= target_rows] or [1]
    th = max(fits)
    while th > 1 and N * (H // th) < min_grid_steps:
        smaller = [d for d in divs if d < th]
        if not smaller:
            break
        th = max(smaller)
    return th


def deconv2x2s2_prod_relu_nhwc(x, y, w4, b, *, target_rows=1024, min_grid_steps=4,
                               compute_dtype=jnp.bfloat16):
    """relu( ConvTranspose2d(x; k=2, s=2) * y ), NHWC end-to-end (no HBM transposes).

    x:  [N, H, W, Cin]        y: [N, 2H, 2W, Cout]
    w4: [Cin, 4*Cout]         (from pack_deconv_weight)
    b:  [Cout]
    returns [N, 2H, 2W, Cout] in compute_dtype.
    """
    N, H, W, Cin = x.shape
    Ny, H2, W2, Cout = y.shape
    assert (Ny, H2, W2) == (N, 2 * H, 2 * W)
    assert w4.shape == (Cin, 4 * Cout)

    th = _pick_row_tile(N, H, W, target_rows, min_grid_steps)
    rows = th * W
    assert rows % 8 == 0, "row tile must be a multiple of 8"
    # TODO(synk): ragged tails (H not divisible by a useful th) would need a masked tail tile.
    HT = H // th

    # ---- zero-cost layout plumbing: pure reshapes, no HBM transpose ---------
    x2d = x.reshape(N * H * W, Cin).astype(compute_dtype)
    y5 = y.reshape(N, H, 2, W, 2 * Cout).astype(compute_dtype)
    w4 = w4.astype(compute_dtype)
    b4 = jnp.tile(b.astype(jnp.float32), (4,)).reshape(1, 4 * Cout)

    # ---- explicit VMEM budget (v7x has 64 MiB physical; v5e scoped default 16 MiB) ----
    itemsize = jnp.dtype(compute_dtype).itemsize
    tile_io = rows * Cin * itemsize + 2 * rows * 4 * Cout * itemsize     # x + y + out tiles
    resident = Cin * 4 * Cout * itemsize + 4 * Cout * 4                  # weights + bias
    acc_scr = rows * 4 * Cout * 4                                        # f32 accumulator value
    vmem_limit = int(min(max(2 * tile_io + resident + 2 * acc_scr + (4 << 20), 16 << 20),
                         48 << 20))

    out5 = pl.pallas_call(
        _deconv_prod_relu_kernel,
        out_shape=jax.ShapeDtypeStruct((N, H, 2, W, 2 * Cout), compute_dtype),
        grid_spec=pltpu.PrefetchScalarGridSpec(
            num_scalar_prefetch=0,
            grid=(N, HT),
            in_specs=[
                pl.BlockSpec((rows, Cin), lambda n, i: (n * HT + i, 0)),
                pl.BlockSpec((Cin, 4 * Cout), lambda n, i: (0, 0)),
                pl.BlockSpec((1, 4 * Cout), lambda n, i: (0, 0)),
                pl.BlockSpec((1, th, 2, W, 2 * Cout), lambda n, i: (n, i, 0, 0, 0)),
            ],
            out_specs=pl.BlockSpec((1, th, 2, W, 2 * Cout), lambda n, i: (n, i, 0, 0, 0)),
        ),
        compiler_params=pltpu.CompilerParams(
            dimension_semantics=("parallel", "parallel"),
            vmem_limit_bytes=vmem_limit),
    )(x2d, w4, b4, y5)

    return out5.reshape(N, 2 * H, 2 * W, Cout)   # free reshape back to NHWC


def deconv2x2s2_prod_relu_nchw(x_nchw, y_nchw, w, b, **kwargs):
    """PyTorch-facing adapter matching _deconv_addN(x, y, 'EltwisePROD') in NCHW.

    NOTE: the NCHW<->NHWC transposes here each cost a full HBM round trip; the
    recommended fast path keeps features NHWC end-to-end (deconv2x2s2_prod_relu_nhwc).
    """
    x = jnp.transpose(x_nchw, (0, 2, 3, 1))
    y = jnp.transpose(y_nchw, (0, 2, 3, 1))
    out = deconv2x2s2_prod_relu_nhwc(x, y, pack_deconv_weight(w), b, **kwargs)
    return jnp.transpose(out, (0, 3, 1, 2))


def _reference_nhwc(x, y, w, b):
    # out[n, 2i+kh, 2j+kw, o] = sum_c x[n,i,j,c] * w[c,o,kh,kw] + b[o]; then *y; relu
    up = jnp.einsum('nijc,cokl->nikjlo', x, w)          # (N, H, 2, W, 2, Cout)
    N, H, _, W, _, Co = up.shape
    up = up.reshape(N, 2 * H, 2 * W, Co) + b[None, None, None, :]
    return jnp.maximum(up * y, 0.0)


if __name__ == "__main__":
    key = jax.random.PRNGKey(0)
    k1, k2, k3, k4 = jax.random.split(key, 4)

    # Small FPN-style shapes: top feature map x, lateral map y at 2x the resolution.
    N, Cin, Cout, H, W = 2, 128, 128, 16, 16

    # Inputs are carried in bf16 (recommended I/O dtype); weights init mirrors
    # weights_init (Conv weight ~ N(0, 0.02)); a small nonzero bias exercises the bias path.
    x = jax.random.normal(k1, (N, H, W, Cin), dtype=jnp.float32).astype(jnp.bfloat16)
    y = jax.random.normal(k2, (N, 2 * H, 2 * W, Cout), dtype=jnp.float32).astype(jnp.bfloat16)
    w = (0.02 * jax.random.normal(k3, (Cin, Cout, 2, 2), dtype=jnp.float32)).astype(jnp.bfloat16)
    b = (0.1 * jax.random.normal(k4, (Cout,), dtype=jnp.float32))

    # --- NHWC fast path -------------------------------------------------------
    out = deconv2x2s2_prod_relu_nhwc(x, y, pack_deconv_weight(w), b)
    out = jax.block_until_ready(out)

    # f32 reference on the same bf16-quantized inputs; remaining error is the
    # final bf16 store rounding (+ accumulation-order noise).
    ref = _reference_nhwc(x.astype(jnp.float32), y.astype(jnp.float32),
                          w.astype(jnp.float32), b)
    ref = jax.block_until_ready(ref)
    np.testing.assert_allclose(np.asarray(out, dtype=np.float32), np.asarray(ref),
                               rtol=2e-2, atol=2e-2)

    # --- NCHW (PyTorch layout) adapter ---------------------------------------
    x_nchw = jnp.transpose(x, (0, 3, 1, 2))
    y_nchw = jnp.transpose(y, (0, 3, 1, 2))
    out_nchw = jax.block_until_ready(deconv2x2s2_prod_relu_nchw(x_nchw, y_nchw, w, b))
    ref_nchw = jnp.transpose(ref, (0, 3, 1, 2))
    np.testing.assert_allclose(np.asarray(out_nchw, dtype=np.float32), np.asarray(ref_nchw),
                               rtol=2e-2, atol=2e-2)

    print("KERNEL_OK")
</pallas_src>

<mosaic_0001>
module attributes {stable_mosaic.version = 11 : i64} {
  func.func @_deconv_prod_relu_kernel(%arg0: i32, %arg1: i32, %arg2: memref<128x128xbf16, #tpu.memory_space<vmem>>, %arg3: memref<128x512xbf16, #tpu.memory_space<vmem>>, %arg4: memref<1x512xf32, #tpu.memory_space<vmem>>, %arg5: memref<1x8x2x16x256xbf16, #tpu.memory_space<vmem>>, %arg6: memref<1x8x2x16x256xbf16, #tpu.memory_space<vmem>>) attributes {dimension_semantics = [#tpu.dimension_semantics<parallel>, #tpu.dimension_semantics<parallel>], iteration_bounds = array<i64: 2, 2>, scalar_prefetch = 0 : i64, scratch_operands = 0 : i64, tpu.core_type = #tpu.core_type<tc>, window_params = [{transform_indices = @transform_0, window_bounds = array<i64: 128, 128>}, {pipeline_mode = #tpu.pipeline_mode<synchronous>, transform_indices = @transform_1, window_bounds = array<i64: 128, 512>}, {pipeline_mode = #tpu.pipeline_mode<synchronous>, transform_indices = @transform_2, window_bounds = array<i64: 1, 512>}, {transform_indices = @transform_3, window_bounds = array<i64: 1, 8, 2, 16, 256>}, {transform_indices = @transform_4, window_bounds = array<i64: 1, 8, 2, 16, 256>}]} {
    %c0 = arith.constant 0 : index
    %c0_0 = arith.constant 0 : index
    %0 = vector.load %arg2[%c0, %c0_0] : memref<128x128xbf16, #tpu.memory_space<vmem>>, vector<128x128xbf16>
    %c0_1 = arith.constant 0 : index
    %c0_2 = arith.constant 0 : index
    %1 = vector.load %arg3[%c0_1, %c0_2] : memref<128x512xbf16, #tpu.memory_space<vmem>>, vector<128x512xbf16>
    %cst = arith.constant dense<0.000000e+00> : vector<128x512xf32>
    %2 = tpu.matmul %0, %1, %cst {dimension_numbers = #tpu.dot_dimension_numbers<[1], [0], [0], [1], [0, 0, 1, 1], [], []>} : vector<128x128xbf16>, vector<128x512xbf16>, vector<128x512xf32> -> vector<128x512xf32>
    %c0_3 = arith.constant 0 : index
    %c0_4 = arith.constant 0 : index
    %3 = vector.load %arg4[%c0_3, %c0_4] : memref<1x512xf32, #tpu.memory_space<vmem>>, vector<1x512xf32>
    %4 = vector.broadcast %3 : vector<1x512xf32> to vector<128x512xf32>
    %5 = arith.addf %2, %4 : vector<128x512xf32>
    %6 = vector.extract_strided_slice %5 {offsets = [0, 0], sizes = [128, 256], strides = [1, 1]} : vector<128x512xf32> to vector<128x256xf32>
    %7 = vector.shape_cast %6 : vector<128x256xf32> to vector<8x16x256xf32>
    %c0_5 = arith.constant 0 : index
    %c0_6 = arith.constant 0 : index
    %c0_7 = arith.constant 0 : index
    %c0_8 = arith.constant 0 : index
    %c0_9 = arith.constant 0 : index
    %8 = vector.load %arg5[%c0_5, %c0_6, %c0_7, %c0_8, %c0_9] : memref<1x8x2x16x256xbf16, #tpu.memory_space<vmem>>, vector<1x8x1x16x256xbf16>
    %9 = vector.shape_cast %8 : vector<1x8x1x16x256xbf16> to vector<8x16x256xbf16>
    %10 = arith.extf %9 : vector<8x16x256xbf16> to vector<8x16x256xf32>
    %11 = arith.mulf %7, %10 : vector<8x16x256xf32>
    %cst_10 = arith.constant 0.000000e+00 : f32
    %12 = vector.broadcast %cst_10 : f32 to vector<8x16x256xf32>
    %13 = arith.maximumf %11, %12 : vector<8x16x256xf32>
    %14 = arith.truncf %13 : vector<8x16x256xf32> to vector<8x16x256xbf16>
    %c0_11 = arith.constant 0 : index
    %c0_12 = arith.constant 0 : index
    %c0_13 = arith.constant 0 : index
    %c0_14 = arith.constant 0 : index
    %c0_15 = arith.constant 0 : index
    %15 = vector.load %arg6[%c0_11, %c0_12, %c0_13, %c0_14, %c0_15] : memref<1x8x2x16x256xbf16, #tpu.memory_space<vmem>>, vector<1x8x1x16x256xbf16>
    %16 = vector.shape_cast %15 : vector<1x8x1x16x256xbf16> to vector<8x16x256xbf16>
    %17 = vector.shape_cast %14 : vector<8x16x256xbf16> to vector<1x8x1x16x256xbf16>
    tpu.vector_store %arg6[%c0_11, %c0_12, %c0_13, %c0_14, %c0_15], %17 {strides = array<i32>} : memref<1x8x2x16x256xbf16, #tpu.memory_space<vmem>>, vector<1x8x1x16x256xbf16>,
    %18 = vector.extract_strided_slice %5 {offsets = [0, 256], sizes = [128, 256], strides = [1, 1]} : vector<128x512xf32> to vector<128x256xf32>
    %19 = vector.shape_cast %18 : vector<128x256xf32> to vector<8x16x256xf32>
    %c0_16 = arith.constant 0 : index
    %c0_17 = arith.constant 0 : index
    %c1 = arith.constant 1 : index
    %c0_18 = arith.constant 0 : index
    %c0_19 = arith.constant 0 : index
    %20 = vector.load %arg5[%c0_16, %c0_17, %c1, %c0_18, %c0_19] : memref<1x8x2x16x256xbf16, #tpu.memory_space<vmem>>, vector<1x8x1x16x256xbf16>
    %21 = vector.shape_cast %20 : vector<1x8x1x16x256xbf16> to vector<8x16x256xbf16>
    %22 = arith.extf %21 : vector<8x16x256xbf16> to vector<8x16x256xf32>
    %23 = arith.mulf %19, %22 : vector<8x16x256xf32>
    %cst_20 = arith.constant 0.000000e+00 : f32
    %24 = vector.broadcast %cst_20 : f32 to vector<8x16x256xf32>
    %25 = arith.maximumf %23, %24 : vector<8x16x256xf32>
    %26 = arith.truncf %25 : vector<8x16x256xf32> to vector<8x16x256xbf16>
    %c0_21 = arith.constant 0 : index
    %c0_22 = arith.constant 0 : index
    %c1_23 = arith.constant 1 : index
    %c0_24 = arith.constant 0 : index
    %c0_25 = arith.constant 0 : index
    %27 = vector.load %arg6[%c0_21, %c0_22, %c1_23, %c0_24, %c0_25] : memref<1x8x2x16x256xbf16, #tpu.memory_space<vmem>>, vector<1x8x1x16x256xbf16>
    %28 = vector.shape_cast %27 : vector<1x8x1x16x256xbf16> to vector<8x16x256xbf16>
    %29 = vector.shape_cast %26 : vector<8x16x256xbf16> to vector<1x8x1x16x256xbf16>
    tpu.vector_store %arg6[%c0_21, %c0_22, %c1_23, %c0_24, %c0_25], %29 {strides = array<i32>} : memref<1x8x2x16x256xbf16, #tpu.memory_space<vmem>>, vector<1x8x1x16x256xbf16>,
    return
  }
  func.func @transform_0(%arg0: i32, %arg1: i32) -> (i32, i32) {
    %c2_i32 = arith.constant 2 : i32
    %0 = arith.muli %arg0, %c2_i32 : i32
    %1 = arith.addi %0, %arg1 : i32
    %c0_i32 = arith.constant 0 : i32
    %c0_i32_0 = arith.constant 0 : i32
    return %1, %c0_i32 : i32, i32
  }
  func.func @transform_1(%arg0: i32, %arg1: i32) -> (i32, i32) {
    %c0_i32 = arith.constant 0 : i32
    %c0_i32_0 = arith.constant 0 : i32
    %c0_i32_1 = arith.constant 0 : i32
    return %c0_i32, %c0_i32_0 : i32, i32
  }
  func.func @transform_2(%arg0: i32, %arg1: i32) -> (i32, i32) {
    %c0_i32 = arith.constant 0 : i32
    %c0_i32_0 = arith.constant 0 : i32
    %c0_i32_1 = arith.constant 0 : i32
    return %c0_i32, %c0_i32_0 : i32, i32
  }
  func.func @transform_3(%arg0: i32, %arg1: i32) -> (i32, i32, i32, i32, i32) {
    %c0_i32 = arith.constant 0 : i32
    %c0_i32_0 = arith.constant 0 : i32
    %c0_i32_1 = arith.constant 0 : i32
    %c0_i32_2 = arith.constant 0 : i32
    return %arg0, %arg1, %c0_i32, %c0_i32_0, %c0_i32_1 : i32, i32, i32, i32, i32
  }
  func.func @transform_4(%arg0: i32, %arg1: i32) -> (i32, i32, i32, i32, i32) {
    %c0_i32 = arith.constant 0 : i32
    %c0_i32_0 = arith.constant 0 : i32
    %c0_i32_1 = arith.constant 0 : i32
    %c0_i32_2 = arith.constant 0 : i32
    return %arg0, %arg1, %c0_i32, %c0_i32_0, %c0_i32_1 : i32, i32, i32, i32, i32
  }
}

</mosaic_0001>

<llo_original>
// kernel: tpu_custom_call.1
$region0: #{tpu_custom_call.1}
  #allocation0 [shape = 'u32[]', space=smem, size = 0x4, offset = 0x4, fixed_abs, tag = 'smem constant byte address 0x4 - core index']
  #allocation1 [shape = 'u32[144,128]{1,0:T(1,128)}', space=vmem, size = 0x12000, scoped, tag = 'internal scratch']
  %s0 = inlined_call_operand.hbm [shape: bf16[512,128], index: 0, kind: input, shape index: {}]
  %s1 = inlined_call_operand.hbm [shape: bf16[128,512], index: 1, kind: input, shape index: {}]
  %s2 = inlined_call_operand.vmem [shape: f32[1,512], index: 2, kind: input, shape index: {}]
  %s3 = inlined_call_operand.hbm [shape: bf16[2,16,2,16,256], index: 3, kind: input, shape index: {}]
  %s4 = inlined_call_operand.hbm [shape: bf16[2,16,2,16,256], index: 4, kind: output, shape index: {}]
  %s5 = sld [smem:[#allocation0]]
  $region61: #{tpu_custom_call.1} parent=0
    _
  %s7 = ssub.s32 1, %s5
  %s8 = scalar_select 0, %s7, %s5
  $region1: #{tpu_custom_call.1} parent=0
    #allocation2 [shape = 'u8[65536]{0}', space=vmem, size = 0x10000, scoped, tag = 'input window, operand 0']
    #allocation3 [shape = 's32[2]{0}', space=sflag, size = 0x8, scoped, tag = 'scoped memory for tpu_custom_call.1']
    #allocation4 [shape = 's32[2]{0}', space=sflag, size = 0x8, scoped, tag = 'scoped memory for tpu_custom_call.1']
    #allocation5 [shape = 'u8[131072]{0}', space=vmem, size = 0x20000, scoped, tag = 'input window, operand 1, single buffered']
    #allocation6 [shape = 's32[1]{0}', space=sflag, size = 0x4, scoped, tag = 'scoped memory for tpu_custom_call.1']
    #allocation7 [shape = 'u8[262144]{0}', space=vmem, size = 0x40000, scoped, tag = 'input window, operand 3']
    #allocation8 [shape = 'u8[262144]{0}', space=vmem, size = 0x40000, scoped, tag = 'output window, operand 0']
    %9 = vsyncpa [#allocation3], 0
    %s10 = scalar_lea.sflag [#allocation3], 1
    %11 = vsyncpa %s10, 0
    %12 = vsyncpa [#allocation6], 0
    %13 = vsyncpa [#allocation4], 0
    %s14 = scalar_lea.sflag [#allocation4], 1
    %15 = vsyncpa %s14, 0
    loop: start=0, step=1, limit=6
    $region2: #{tpu_custom_call.1} parent=1 // loop_pre_header
      _
    $region3: #{tpu_custom_call.1} parent=1 // loop_header
      %s17 = sphi 0, %s21
      %p18 = scmp.ge.s32.totalorder %s17, 6
      %s24 = sphi 0, %s36
      %s25 = sphi 0, %s32
      %s26 = sphi 0, %s24
      %s27 = sphi 0, %s25
      %s28 = sphi 0, %s26
      %s29 = sphi 0, %s27
      %s43 = sphi 0, %s45
      %s46 = sphi 0, %s43
      %s47 = sphi 0, %s46
      %s63 = sphi 0, %s47
      %s67 = sphi 0, %s67
      %s69 = sphi 0, %s67
      %s70 = sphi 0, %s69
      %s84 = sphi 0, %s70
      %s88 = sphi 0, %s88
      %s90 = sphi 0, %s88
      %s91 = sphi 0, %s90
      %s105 = sphi 0, %s91
      %s113 = sphi 0, %s115
      %s116 = sphi 0, %s113
      %s117 = sphi 0, %s116
      %s133 = sphi 0, %s117
      %s141 = sphi 0, %s143
      %s144 = sphi 0, %s141
      %s145 = sphi 0, %s144
      %s161 = sphi 0, %s145
    $region4: #{tpu_custom_call.1} parent=1 // loop_header_branch
      %20 = sbr.rel (%p18) target = $region8
    $region5: #{tpu_custom_call.1} parent=1 // loop_body
      %s22 = ssub.s32 %s17, 1
      %s23 = ssub.s32 %s17, 2
      %s30 = sadd.s32 1, %s25
      %p31 = scmp.ge.s32.totalorder %s30, 2
      %s32 = scalar_select %p31, 0, %s30
      %s33 = sadd.s32 1, %s24
      %s34 = scalar_select %p31, %s33, %s24
      %p35 = scmp.ge.s32.totalorder %s34, 2
      %s36 = scalar_select %p35, 0, %s34
      %s37 = smul.u32 %s24, 2
      %s38 = sadd.s32 %s37, %s25
      %s39 = smul.u32 %s36, 2
      %s40 = sadd.s32 %s39, %s32
      %s41 = ssub.s32 %s38, %s40
      %p42 = scmp.eq.s32.totalorder %s41, 0
      %s44 = sadd.s32 %s43, 1
      %s45 = scalar_select %p42, %s43, %s44
      %p48 = pneg %p42
      %p49 = scmp.eq.s32.totalorder %s17, 3
      %p50 = por %p48, %p49
      %p51 = scmp.ne.s32.totalorder %s43, %s46
      %p52 = scmp.eq.s32.totalorder %s17, 0
      %p53 = por %p51, %p52
      %p54 = scmp.ne.s32.totalorder %s43, %s46
      %p55 = scmp.eq.s32.totalorder %s22, 3
      %p56 = por %p54, %p55
      %p57 = scmp.ne.s32.totalorder %s46, %s47
      %p58 = scmp.eq.s32.totalorder %s22, 0
      %p59 = por %p57, %p58
      %p60 = scmp.ne.s32.totalorder %s46, %s47
      %p61 = scmp.eq.s32.totalorder %s23, 3
      %p62 = por %p60, %p61
      %p64 = scmp.ne.s32.totalorder %s47, %s63
      %p65 = scmp.eq.s32.totalorder %s23, 0
      %p66 = por %p64, %p65
      %s68 = sadd.s32 %s67, 1
      %p71 = scmp.eq.s32.totalorder %s17, 3
      %p72 = scmp.ne.s32.totalorder %s67, %s69
      %p73 = scmp.eq.s32.totalorder %s17, 0
      %p74 = por %p72, %p73
      %p75 = scmp.ne.s32.totalorder %s67, %s69
      %p76 = scmp.eq.s32.totalorder %s22, 3
      %p77 = por %p75, %p76
      %p78 = scmp.ne.s32.totalorder %s69, %s70
      %p79 = scmp.eq.s32.totalorder %s22, 0
      %p80 = por %p78, %p79
      %p81 = scmp.ne.s32.totalorder %s69, %s70
      %p82 = scmp.eq.s32.totalorder %s23, 3
      %p83 = por %p81, %p82
      %p85 = scmp.ne.s32.totalorder %s70, %s84
      %p86 = scmp.eq.s32.totalorder %s23, 0
      %p87 = por %p85, %p86
      %s89 = sadd.s32 %s88, 1
      %p92 = scmp.eq.s32.totalorder %s17, 3
      %p93 = scmp.ne.s32.totalorder %s88, %s90
      %p94 = scmp.eq.s32.totalorder %s17, 0
      %p95 = por %p93, %p94
      %p96 = scmp.ne.s32.totalorder %s88, %s90
      %p97 = scmp.eq.s32.totalorder %s22, 3
      %p98 = por %p96, %p97
      %p99 = scmp.ne.s32.totalorder %s90, %s91
      %p100 = scmp.eq.s32.totalorder %s22, 0
      %p101 = por %p99, %p100
      %p102 = scmp.ne.s32.totalorder %s90, %s91
      %p103 = scmp.eq.s32.totalorder %s23, 3
      %p104 = por %p102, %p103
      %p106 = scmp.ne.s32.totalorder %s91, %s105
      %p107 = scmp.eq.s32.totalorder %s23, 0
      %p108 = por %p106, %p107
      %s109 = ssub.s32 %s24, %s36
      %s110 = ssub.s32 %s25, %s32
      %s111 = sor.u32 %s109, %s110
      %p112 = scmp.eq.s32.totalorder %s111, 0
      %s114 = sadd.s32 %s113, 1
      %s115 = scalar_select %p112, %s113, %s114
      %p118 = pneg %p112
      %p119 = scmp.eq.s32.totalorder %s17, 3
      %p120 = por %p118, %p119
      %p121 = scmp.ne.s32.totalorder %s113, %s116
      %p122 = scmp.eq.s32.totalorder %s17, 0
      %p123 = por %p121, %p122
      %p124 = scmp.ne.s32.totalorder %s113, %s116
      %p125 = scmp.eq.s32.totalorder %s22, 3
      %p126 = por %p124, %p125
      %p127 = scmp.ne.s32.totalorder %s116, %s117
      %p128 = scmp.eq.s32.totalorder %s22, 0
      %p129 = por %p127, %p128
      %p130 = scmp.ne.s32.totalorder %s116, %s117
      %p131 = scmp.eq.s32.totalorder %s23, 3
      %p132 = por %p130, %p131
      %p134 = scmp.ne.s32.totalorder %s117, %s133
      %p135 = scmp.eq.s32.totalorder %s23, 0
      %p136 = por %p134, %p135
      %s137 = ssub.s32 %s24, %s36
      %s138 = ssub.s32 %s25, %s32
      %s139 = sor.u32 %s137, %s138
      %p140 = scmp.eq.s32.totalorder %s139, 0
      %s142 = sadd.s32 %s141, 1
      %s143 = scalar_select %p140, %s141, %s142
      %p146 = pneg %p140
      %p147 = scmp.eq.s32.totalorder %s17, 3
      %p148 = por %p146, %p147
      %p149 = scmp.ne.s32.totalorder %s141, %s144
      %p150 = scmp.eq.s32.totalorder %s17, 0
      %p151 = por %p149, %p150
      %p152 = scmp.ne.s32.totalorder %s141, %s144
      %p153 = scmp.eq.s32.totalorder %s22, 3
      %p154 = por %p152, %p153
      %p155 = scmp.ne.s32.totalorder %s144, %s145
      %p156 = scmp.eq.s32.totalorder %s22, 0
      %p157 = por %p155, %p156
      %p158 = scmp.ne.s32.totalorder %s144, %s145
      %p159 = scmp.eq.s32.totalorder %s23, 3
      %p160 = por %p158, %p159
      %p162 = scmp.ne.s32.totalorder %s145, %s161
      %p163 = scmp.eq.s32.totalorder %s23, 0
      %p164 = por %p162, %p163
      %p165 = scmp.le.s32.totalorder 1, %s17
      %p166 = scmp.lt.s32.totalorder %s17, 5
      %p167 = pnand %p165, %p166
      %p168 = pneg %p167
      // Predicated region
      $region9: #{tpu_custom_call.1} parent=5 // pred_check
        _
      $region10: #{tpu_custom_call.1} parent=5 // pred_check_branch
        %170 = sbr.rel (%p167) target = $region12
      $region11: #{tpu_custom_call.1} parent=5 // pred_region
        %s171 = ssub.s32 %s17, 1
        // Predicated region
        $region13: #{tpu_custom_call.1} parent=11 // pred_check
          %p172 = pneg %p80
        $region14: #{tpu_custom_call.1} parent=11 // pred_check_branch
          %174 = sbr.rel (%p172) target = $region16
        $region15: #{tpu_custom_call.1} parent=11 // pred_region
          %s176 = ssub.s32 4096, 4096
          %177 = vsyncadd [#allocation6], %s176
          %s178 = sshll.u32 [#allocation5], 4
          %s179 = int_to_ptr.vmem [resolvable:$true] %s178
          %184 = dma.hbm_to_vmem [thread:$0]  %s1, 4096, %s179, [#allocation6], 256, 256, 16
        $region16: #{tpu_custom_call.1} parent=11 // pred_fallthru
          _
        // Predicated region
        $region17: #{tpu_custom_call.1} parent=11 // pred_check
          %p185 = pneg %p101
        $region18: #{tpu_custom_call.1} parent=11 // pred_check_branch
          %187 = sbr.rel (%p185) target = $region20
        $region19: #{tpu_custom_call.1} parent=11 // pred_region
          _
        $region20: #{tpu_custom_call.1} parent=11 // pred_fallthru
          _
      $region12: #{tpu_custom_call.1} parent=5 // pred_fallthru
        _
      %p188 = scmp.lt.s32.totalorder %s17, 4
      // Predicated region
      $region21: #{tpu_custom_call.1} parent=5 // pred_check
        %p189 = pneg %p188
      $region22: #{tpu_custom_call.1} parent=5 // pred_check_branch
        %191 = sbr.rel (%p189) target = $region24
      $region23: #{tpu_custom_call.1} parent=5 // pred_region
        // Predicated region
        $region25: #{tpu_custom_call.1} parent=23 // pred_check
          %p192 = pneg %p53
        $region26: #{tpu_custom_call.1} parent=23 // pred_check_branch
          %194 = sbr.rel (%p192) target = $region28
        $region27: #{tpu_custom_call.1} parent=23 // pred_region
          %s195 = sand.u32 %s17, 1
          %s196 = scalar_lea.sflag [#allocation3], %s195
          %s197 = sand.u32 %s43, 1
          %s198 = smul.addr %s197, 64
          %s199 = scalar_lea.vmem [#allocation2], %s198
          %s200 = smul.u32 %s24, 2
          %s201 = sadd.s32 %s200, %s25
          %s202 = smul.u32 16, %s201
          %s204 = ssub.s32 1024, 1024
          %205 = vsyncadd %s196, %s204
          %s206 = smul.addr %s202, 64
          %s207 = scalar_lea.hbm %s0, %s206
          %s208 = sshll.u32 %s199, 4
          %s209 = int_to_ptr.vmem [resolvable:$true] %s208
          %214 = dma.hbm_to_vmem [thread:$0]  %s207, 1024, %s209, %s196, 64, 64, 4
        $region28: #{tpu_custom_call.1} parent=23 // pred_fallthru
          _
        // Predicated region
        $region29: #{tpu_custom_call.1} parent=23 // pred_check
          %p215 = pneg %p123
        $region30: #{tpu_custom_call.1} parent=23 // pred_check_branch
          %217 = sbr.rel (%p215) target = $region32
        $region31: #{tpu_custom_call.1} parent=23 // pred_region
          %s218 = sand.u32 %s17, 1
          %s219 = scalar_lea.sflag [#allocation3], %s218
          %s220 = sand.u32 %s113, 1
          %s221 = smul.addr %s220, 256
          %s222 = scalar_lea.vmem [#allocation7], %s221
          %s223 = smul.u32 8, %s25
          %s225 = ssub.s32 4096, 4096
          %226 = vsyncadd %s219, %s225
          %s227 = smul.addr %s223, 8
          %s228 = smul.addr %s24, 128
          %s229 = sadd.s32 %s227, %s228
          %s230 = smul.addr %s229, 64
          %s231 = scalar_lea.hbm %s3, %s230
          %s232 = sshll.u32 %s222, 4
          %s233 = int_to_ptr.vmem [resolvable:$true] %s232
          %238 = dma.hbm_to_vmem [thread:$0]  %s231, 4096, %s233, %s219, 128, 128, 8
        $region32: #{tpu_custom_call.1} parent=23 // pred_fallthru
          _
      $region24: #{tpu_custom_call.1} parent=5 // pred_fallthru
        _
      %p239 = scmp.le.s32.totalorder 1, %s17
      %p240 = scmp.lt.s32.totalorder %s17, 5
      %p241 = pnand %p239, %p240
      %p242 = pneg %p241
      // Predicated region
      $region33: #{tpu_custom_call.1} parent=5 // pred_check
        _
      $region34: #{tpu_custom_call.1} parent=5 // pred_check_branch
        %244 = sbr.rel (%p241) target = $region36
      $region35: #{tpu_custom_call.1} parent=5 // pred_region
        %s245 = ssub.s32 %s17, 1
        %s246 = sand.u32 %s22, 1
        %s247 = scalar_lea.sflag [#allocation3], %s246
        %s248 = sand.u32 %s46, 1
        %s249 = smul.addr %s248, 64
        %s250 = scalar_lea.vmem [#allocation2], %s249
        // Predicated region
        $region37: #{tpu_custom_call.1} parent=35 // pred_check
          %p251 = pneg %p59
        $region38: #{tpu_custom_call.1} parent=35 // pred_check_branch
          %253 = sbr.rel (%p251) target = $region40
        $region39: #{tpu_custom_call.1} parent=35 // pred_region
          %254 = dma.done %s247, 1024
        $region40: #{tpu_custom_call.1} parent=35 // pred_fallthru
          _
        // Predicated region
        $region41: #{tpu_custom_call.1} parent=35 // pred_check
          %p255 = pneg %p80
        $region42: #{tpu_custom_call.1} parent=35 // pred_check_branch
          %257 = sbr.rel (%p255) target = $region44
        $region43: #{tpu_custom_call.1} parent=35 // pred_region
          %258 = dma.done [#allocation6], 4096
        $region44: #{tpu_custom_call.1} parent=35 // pred_fallthru
          _
        %s259 = sand.u32 %s22, 1
        %s260 = scalar_lea.sflag [#allocation3], %s259
        %s261 = sand.u32 %s116, 1
        %s262 = smul.addr %s261, 256
        %s263 = scalar_lea.vmem [#allocation7], %s262
        // Predicated region
        $region45: #{tpu_custom_call.1} parent=35 // pred_check
          %p264 = pneg %p129
        $region46: #{tpu_custom_call.1} parent=35 // pred_check_branch
          %266 = sbr.rel (%p264) target = $region48
        $region47: #{tpu_custom_call.1} parent=35 // pred_region
          %267 = dma.done %s260, 4096
        $region48: #{tpu_custom_call.1} parent=35 // pred_fallthru
          _
        %s268 = sand.u32 %s22, 1
        %s269 = scalar_lea.sflag [#allocation3], %s268
        %s270 = sand.u32 %s46, 1
        %s271 = smul.addr %s270, 64
        %s272 = scalar_lea.vmem [#allocation2], %s271
        %p273 = pneg %p59
        %p274 = pneg %p56
        %p275 = pneg %p80
        %p276 = pneg %p77
        %p277 = pneg %p101
        %p278 = pneg %p98
        %s279 = sand.u32 %s22, 1
        %s280 = scalar_lea.sflag [#allocation3], %s279
        %s281 = sand.u32 %s116, 1
        %s282 = smul.addr %s281, 256
        %s283 = scalar_lea.vmem [#allocation7], %s282
        %p284 = pneg %p129
        %p285 = pneg %p126
        %p286 = pneg %p157
        %p287 = pneg %p154
        %s288 = sand.u32 %s144, 1
        %s289 = scalar_lea.sflag [#allocation4], %s288
        %s290 = sand.u32 %s144, 1
        %s291 = smul.addr %s290, 256
        %s292 = scalar_lea.vmem [#allocation8], %s291
        %s293 = smul.u32 %s26, 2
        %s294 = sadd.s32 %s293, %s27
        %s295 = smul.u32 16, %s294
        %s296 = smul.u32 8, %s27
        %s297 = smul.u32 8, %s27
        %v299 = vld [vmem:[%s250] sm:$0xf]
        %v300 = vld [vmem:[%s250 + $0x4] sm:$0xf]
        %v301 = vld [vmem:[%s250 + $0x8] sm:$0xf]
        %v302 = vld [vmem:[%s250 + $0xc] sm:$0xf]
        %v303 = vld [vmem:[%s250 + $0x10] sm:$0xf]
        %v304 = vld [vmem:[%s250 + $0x14] sm:$0xf]
        %v305 = vld [vmem:[%s250 + $0x18] sm:$0xf]
        %v306 = vld [vmem:[%s250 + $0x1c] sm:$0xf]
        %v307 = vld [vmem:[%s250 + $0x20] sm:$0xf]
        %v308 = vld [vmem:[%s250 + $0x24] sm:$0xf]
        %v309 = vld [vmem:[%s250 + $0x28] sm:$0xf]
        %v310 = vld [vmem:[%s250 + $0x2c] sm:$0xf]
        %v311 = vld [vmem:[%s250 + $0x30] sm:$0xf]
        %v312 = vld [vmem:[%s250 + $0x34] sm:$0xf]
        %v313 = vld [vmem:[%s250 + $0x38] sm:$0xf]
        %v314 = vld [vmem:[%s250 + $0x3c] sm:$0xf]
        %v315 = vld [vmem:[#allocation5] sm:$0xff]
        %v316 = vld [vmem:[#allocation5 + $0x8] sm:$0xff]
        %v317 = vld [vmem:[#allocation5 + $0x10] sm:$0xff]
        %v318 = vld [vmem:[#allocation5 + $0x18] sm:$0xff]
        %v319 = vld [vmem:[#allocation5 + $0x20] sm:$0xff]
        %v320 = vld [vmem:[#allocation5 + $0x28] sm:$0xff]
        %v321 = vld [vmem:[#allocation5 + $0x30] sm:$0xff]
        %v322 = vld [vmem:[#allocation5 + $0x38] sm:$0xff]
        %v323 = vld [vmem:[#allocation5 + $0x40] sm:$0xff]
        %v324 = vld [vmem:[#allocation5 + $0x48] sm:$0xff]
        %v325 = vld [vmem:[#allocation5 + $0x50] sm:$0xff]
        %v326 = vld [vmem:[#allocation5 + $0x58] sm:$0xff]
        %v327 = vld [vmem:[#allocation5 + $0x60] sm:$0xff]
        %v328 = vld [vmem:[#allocation5 + $0x68] sm:$0xff]
        %v329 = vld [vmem:[#allocation5 + $0x70] sm:$0xff]
        %v330 = vld [vmem:[#allocation5 + $0x78] sm:$0xff]
        %v331 = vld [vmem:[#allocation5 + $0x80] sm:$0xff]
        %v332 = vld [vmem:[#allocation5 + $0x88] sm:$0xff]
        %v333 = vld [vmem:[#allocation5 + $0x90] sm:$0xff]
        %v334 = vld [vmem:[#allocation5 + $0x98] sm:$0xff]
        %v335 = vld [vmem:[#allocation5 + $0xa0] sm:$0xff]
        %v336 = vld [vmem:[#allocation5 + $0xa8] sm:$0xff]
        %v337 = vld [vmem:[#allocation5 + $0xb0] sm:$0xff]
        %v338 = vld [vmem:[#allocation5 + $0xb8] sm:$0xff]
        %v339 = vld [vmem:[#allocation5 + $0xc0] sm:$0xff]
        %v340 = vld [vmem:[#allocation5 + $0xc8] sm:$0xff]
        %v341 = vld [vmem:[#allocation5 + $0xd0] sm:$0xff]
        %v342 = vld [vmem:[#allocation5 + $0xd8] sm:$0xff]
        %v343 = vld [vmem:[#allocation5 + $0xe0] sm:$0xff]
        %v344 = vld [vmem:[#allocation5 + $0xe8] sm:$0xff]
        %v345 = vld [vmem:[#allocation5 + $0xf0] sm:$0xff]
        %v346 = vld [vmem:[#allocation5 + $0xf8] sm:$0xff]
        %v347 = vld [vmem:[%s2] sm:$0xf]
        %v349 = vlaneseq
        %v350 = vshrl.u32 %v349, 7
        %v351 = vsub.s32 0, %v350
        %v352 = vrot.slane %v347, %v351
        %v353 = vlaneseq
        %v354 = vshrl.u32 %v353, 7
        %v355 = vsub.s32 1, %v354
        %v356 = vrot.slane %v347, %v355
        %v357 = vlaneseq
        %v358 = vshrl.u32 %v357, 7
        %v359 = vsub.s32 2, %v358
        %v360 = vrot.slane %v347, %v359
        %v361 = vlaneseq
        %v362 = vshrl.u32 %v361, 7
        %v363 = vsub.s32 3, %v362
        %v364 = vrot.slane %v347, %v363
        %v385 = vunpack.c.l.b16 %v299
        %v386 = vunpack.c.l.b16 %v300
        %v387 = vunpack.c.l.b16 %v301
        %v388 = vunpack.c.l.b16 %v302
        %v389 = vunpack.c.l.b16 %v303
        %v390 = vunpack.c.l.b16 %v304
        %v391 = vunpack.c.l.b16 %v305
        %v392 = vunpack.c.l.b16 %v306
        %v393 = vunpack.c.l.b16 %v307
        %v394 = vunpack.c.l.b16 %v308
        %v395 = vunpack.c.l.b16 %v309
        %v396 = vunpack.c.l.b16 %v310
        %v397 = vunpack.c.l.b16 %v311
        %v398 = vunpack.c.l.b16 %v312
        %v399 = vunpack.c.l.b16 %v313
        %v400 = vunpack.c.l.b16 %v314
        %v401 = vpack.c.b16 %v386, %v385
        %v402 = vpack.c.b16 %v388, %v387
        %v403 = vpack.c.b16 %v390, %v389
        %v404 = vpack.c.b16 %v392, %v391
        %v405 = vpack.c.b16 %v394, %v393
        %v406 = vpack.c.b16 %v396, %v395
        %v407 = vpack.c.b16 %v398, %v397
        %v408 = vpack.c.b16 %v400, %v399
        %v449 = vunpack.c.l.b16 %v315
        %v450 = vunpack.c.h.b16 %v315
        %v451 = vunpack.c.l.b16 %v316
        %v452 = vunpack.c.h.b16 %v316
        %v453 = vunpack.c.l.b16 %v317
        %v454 = vunpack.c.h.b16 %v317
        %v455 = vunpack.c.l.b16 %v318
        %v456 = vunpack.c.h.b16 %v318
        %v457 = vunpack.c.l.b16 %v319
        %v458 = vunpack.c.h.b16 %v319
        %v459 = vunpack.c.l.b16 %v320
        %v460 = vunpack.c.h.b16 %v320
        %v461 = vunpack.c.l.b16 %v321
        %v462 = vunpack.c.h.b16 %v321
        %v463 = vunpack.c.l.b16 %v322
        %v464 = vunpack.c.h.b16 %v322
        %v465 = vunpack.c.l.b16 %v323
        %v466 = vunpack.c.h.b16 %v323
        %v467 = vunpack.c.l.b16 %v324
        %v468 = vunpack.c.h.b16 %v324
        %v469 = vunpack.c.l.b16 %v325
        %v470 = vunpack.c.h.b16 %v325
        %v471 = vunpack.c.l.b16 %v326
        %v472 = vunpack.c.h.b16 %v326
        %v473 = vunpack.c.l.b16 %v327
        %v474 = vunpack.c.h.b16 %v327
        %v475 = vunpack.c.l.b16 %v328
        %v476 = vunpack.c.h.b16 %v328
        %v477 = vunpack.c.l.b16 %v329
        %v478 = vunpack.c.h.b16 %v329
        %v479 = vunpack.c.l.b16 %v330
        %v480 = vunpack.c.h.b16 %v330
        %v481 = vunpack.c.l.b16 %v331
        %v482 = vunpack.c.h.b16 %v331
        %v483 = vunpack.c.l.b16 %v332
        %v484 = vunpack.c.h.b16 %v332
        %v485 = vunpack.c.l.b16 %v333
        %v486 = vunpack.c.h.b16 %v333
        %v487 = vunpack.c.l.b16 %v334
        %v488 = vunpack.c.h.b16 %v334
        %v489 = vunpack.c.l.b16 %v335
        %v490 = vunpack.c.h.b16 %v335
        %v491 = vunpack.c.l.b16 %v336
        %v492 = vunpack.c.h.b16 %v336
        %v493 = vunpack.c.l.b16 %v337
        %v494 = vunpack.c.h.b16 %v337
        %v495 = vunpack.c.l.b16 %v338
        %v496 = vunpack.c.h.b16 %v338
        %v497 = vunpack.c.l.b16 %v339
        %v498 = vunpack.c.h.b16 %v339
        %v499 = vunpack.c.l.b16 %v340
        %v500 = vunpack.c.h.b16 %v340
        %v501 = vunpack.c.l.b16 %v341
        %v502 = vunpack.c.h.b16 %v341
        %v503 = vunpack.c.l.b16 %v342
        %v504 = vunpack.c.h.b16 %v342
        %v505 = vunpack.c.l.b16 %v343
        %v506 = vunpack.c.h.b16 %v343
        %v507 = vunpack.c.l.b16 %v344
        %v508 = vunpack.c.h.b16 %v344
        %v509 = vunpack.c.l.b16 %v345
        %v510 = vunpack.c.h.b16 %v345
        %v511 = vunpack.c.l.b16 %v346
        %v512 = vunpack.c.h.b16 %v346
        %v513 = vpack.c.b16 %v453, %v449
        %v514 = vpack.c.b16 %v454, %v450
        %v515 = vpack.c.b16 %v455, %v451
        %v516 = vpack.c.b16 %v456, %v452
        %v517 = vpack.c.b16 %v461, %v457
        %v518 = vpack.c.b16 %v462, %v458
        %v519 = vpack.c.b16 %v463, %v459
        %v520 = vpack.c.b16 %v464, %v460
        %v521 = vpack.c.b16 %v469, %v465
        %v522 = vpack.c.b16 %v470, %v466
        %v523 = vpack.c.b16 %v471, %v467
        %v524 = vpack.c.b16 %v472, %v468
        %v525 = vpack.c.b16 %v477, %v473
        %v526 = vpack.c.b16 %v478, %v474
        %v527 = vpack.c.b16 %v479, %v475
        %v528 = vpack.c.b16 %v480, %v476
        %v529 = vpack.c.b16 %v485, %v481
        %v530 = vpack.c.b16 %v486, %v482
        %v531 = vpack.c.b16 %v487, %v483
        %v532 = vpack.c.b16 %v488, %v484
        %v533 = vpack.c.b16 %v493, %v489
        %v534 = vpack.c.b16 %v494, %v490
        %v535 = vpack.c.b16 %v495, %v491
        %v536 = vpack.c.b16 %v496, %v492
        %v537 = vpack.c.b16 %v501, %v497
        %v538 = vpack.c.b16 %v502, %v498
        %v539 = vpack.c.b16 %v503, %v499
        %v540 = vpack.c.b16 %v504, %v500
        %v541 = vpack.c.b16 %v509, %v505
        %v542 = vpack.c.b16 %v510, %v506
        %v543 = vpack.c.b16 %v511, %v507
        %v544 = vpack.c.b16 %v512, %v508
        %577 = vmatprep.subr.bf16.mxu0 %v514
        %578 = vmatpush1.bf16.msra.mxu0 %v513
        %579 = vmatprep.subr.bf16.mxu0 %v518
        %580 = vmatpush1.bf16.msra.mxu0 %v517
        %581 = vmatprep.subr.bf16.mxu0 %v522
        %582 = vmatpush1.bf16.msra.mxu0 %v521
        %583 = vmatprep.subr.bf16.mxu0 %v526
        %584 = vmatpush1.bf16.msra.mxu0 %v525
        %585 = vmatprep.subr.bf16.mxu0 %v530
        %586 = vmatpush1.bf16.msra.mxu0 %v529
        %587 = vmatprep.subr.bf16.mxu0 %v534
        %588 = vmatpush1.bf16.msra.mxu0 %v533
        %589 = vmatprep.subr.bf16.mxu0 %v538
        %590 = vmatpush1.bf16.msra.mxu0 %v537
        %591 = vmatprep.subr.bf16.mxu0 %v542
        %592 = vmatpush1.bf16.msra.mxu0 %v541
        %593 = vmatprep.subr.bf16.mxu0 0
        %594 = vmatpush1.bf16.msra.mxu0 0
        %595 = vmatprep.subr.bf16.mxu0 0
        %596 = vmatpush1.bf16.msra.mxu0 0
        %597 = vmatprep.subr.bf16.mxu0 0
        %598 = vmatpush1.bf16.msra.mxu0 0
        %599 = vmatprep.subr.bf16.mxu0 0
        %600 = vmatpush1.bf16.msra.mxu0 0
        %601 = vmatprep.subr.bf16.mxu0 0
        %602 = vmatpush1.bf16.msra.mxu0 0
        %603 = vmatprep.subr.bf16.mxu0 0
        %604 = vmatpush1.bf16.msra.mxu0 0
        %605 = vmatprep.subr.bf16.mxu0 0
        %606 = vmatpush1.bf16.msra.mxu0 0
        %607 = vmatprep.subr.bf16.mxu0 0
        %608 = vmatpush1.bf16.msra.mxu0 0
        %609 = vmatprep.mubr.bf16.mxu0 0
        %610 = vmatmul.mubr.bf16.gmra.mrb[0].mxu0 %v401
        %v611 = vpop.f32.mrb[0].mxu0
        %v612 = vadd.f32 %v352, %v611
        %v613 = vpop.f32.mrb[0].mxu0
        %v614 = vadd.f32 %v356, %v613
        %v615 = vpop.f32.mrb[0].mxu0
        %v616 = vadd.f32 %v352, %v615
        %v617 = vpop.f32.mrb[0].mxu0
        %v618 = vadd.f32 %v356, %v617
        %619 = vmatprep.mubr.bf16.mxu0 0
        %620 = vmatmul.mubr.bf16.gmra.mrb[0].mxu0 %v402
        %v621 = vpop.f32.mrb[0].mxu0
        %v622 = vadd.f32 %v352, %v621
        %v623 = vpop.f32.mrb[0].mxu0
        %v624 = vadd.f32 %v356, %v623
        %v625 = vpop.f32.mrb[0].mxu0
        %v626 = vadd.f32 %v352, %v625
        %v627 = vpop.f32.mrb[0].mxu0
        %v628 = vadd.f32 %v356, %v627
        %629 = vmatprep.mubr.bf16.mxu0 0
        %630 = vmatmul.mubr.bf16.gmra.mrb[0].mxu0 %v403
        %v631 = vpop.f32.mrb[0].mxu0
        %v632 = vadd.f32 %v352, %v631
        %v633 = vpop.f32.mrb[0].mxu0
        %v634 = vadd.f32 %v356, %v633
        %v635 = vpop.f32.mrb[0].mxu0
        %v636 = vadd.f32 %v352, %v635
        %v637 = vpop.f32.mrb[0].mxu0
        %v638 = vadd.f32 %v356, %v637
        %639 = vmatprep.mubr.bf16.mxu0 0
        %640 = vmatmul.mubr.bf16.gmra.mrb[0].mxu0 %v404
        %v641 = vpop.f32.mrb[0].mxu0
        %v642 = vadd.f32 %v352, %v641
        %v643 = vpop.f32.mrb[0].mxu0
        %v644 = vadd.f32 %v356, %v643
        %v645 = vpop.f32.mrb[0].mxu0
        %v646 = vadd.f32 %v352, %v645
        %v647 = vpop.f32.mrb[0].mxu0
        %v648 = vadd.f32 %v356, %v647
        %649 = vmatprep.mubr.bf16.mxu0 0
        %650 = vmatmul.mubr.bf16.gmra.mrb[0].mxu0 %v405
        %v651 = vpop.f32.mrb[0].mxu0
        %v652 = vadd.f32 %v352, %v651
        %v653 = vpop.f32.mrb[0].mxu0
        %v654 = vadd.f32 %v356, %v653
        %v655 = vpop.f32.mrb[0].mxu0
        %v656 = vadd.f32 %v352, %v655
        %v657 = vpop.f32.mrb[0].mxu0
        %v658 = vadd.f32 %v356, %v657
        %659 = vmatprep.mubr.bf16.mxu0 0
        %660 = vmatmul.mubr.bf16.gmra.mrb[0].mxu0 %v406
        %v661 = vpop.f32.mrb[0].mxu0
        %v662 = vadd.f32 %v352, %v661
        %v663 = vpop.f32.mrb[0].mxu0
        %v664 = vadd.f32 %v356, %v663
        %v665 = vpop.f32.mrb[0].mxu0
        %v666 = vadd.f32 %v352, %v665
        %v667 = vpop.f32.mrb[0].mxu0
        %v668 = vadd.f32 %v356, %v667
        %669 = vmatprep.mubr.bf16.mxu0 0
        %670 = vmatmul.mubr.bf16.gmra.mrb[0].mxu0 %v407
        %v671 = vpop.f32.mrb[0].mxu0
        %v672 = vadd.f32 %v352, %v671
        %v673 = vpop.f32.mrb[0].mxu0
        %v674 = vadd.f32 %v356, %v673
        %v675 = vpop.f32.mrb[0].mxu0
        %v676 = vadd.f32 %v352, %v675
        %v677 = vpop.f32.mrb[0].mxu0
        %v678 = vadd.f32 %v356, %v677
        %679 = vmatprep.mubr.bf16.mxu0 0
        %680 = vmatmul.mubr.bf16.gmra.mrb[0].mxu0 %v408
        %v681 = vpop.f32.mrb[0].mxu0
        %v682 = vadd.f32 %v352, %v681
        %v683 = vpop.f32.mrb[0].mxu0
        %v684 = vadd.f32 %v356, %v683
        %v685 = vpop.f32.mrb[0].mxu0
        %v686 = vadd.f32 %v352, %v685
        %v687 = vpop.f32.mrb[0].mxu0
        %v688 = vadd.f32 %v356, %v687
        %689 = vdwg.mxu0
        %690 = vmatprep.subr.bf16.mxu0 %v516
        %691 = vmatpush1.bf16.msra.mxu0 %v515
        %692 = vmatprep.subr.bf16.mxu0 %v520
        %693 = vmatpush1.bf16.msra.mxu0 %v519
        %694 = vmatprep.subr.bf16.mxu0 %v524
        %695 = vmatpush1.bf16.msra.mxu0 %v523
        %696 = vmatprep.subr.bf16.mxu0 %v528
        %697 = vmatpush1.bf16.msra.mxu0 %v527
        %698 = vmatprep.subr.bf16.mxu0 %v532
        %699 = vmatpush1.bf16.msra.mxu0 %v531
        %700 = vmatprep.subr.bf16.mxu0 %v536
        %701 = vmatpush1.bf16.msra.mxu0 %v535
        %702 = vmatprep.subr.bf16.mxu0 %v540
        %703 = vmatpush1.bf16.msra.mxu0 %v539
        %704 = vmatprep.subr.bf16.mxu0 %v544
        %705 = vmatpush1.bf16.msra.mxu0 %v543
        %706 = vmatprep.subr.bf16.mxu0 0
        %707 = vmatpush1.bf16.msra.mxu0 0
        %708 = vmatprep.subr.bf16.mxu0 0
        %709 = vmatpush1.bf16.msra.mxu0 0
        %710 = vmatprep.subr.bf16.mxu0 0
        %711 = vmatpush1.bf16.msra.mxu0 0
        %712 = vmatprep.subr.bf16.mxu0 0
        %713 = vmatpush1.bf16.msra.mxu0 0
        %714 = vmatprep.subr.bf16.mxu0 0
        %715 = vmatpush1.bf16.msra.mxu0 0
        %716 = vmatprep.subr.bf16.mxu0 0
        %717 = vmatpush1.bf16.msra.mxu0 0
        %718 = vmatprep.subr.bf16.mxu0 0
        %719 = vmatpush1.bf16.msra.mxu0 0
        %720 = vmatprep.subr.bf16.mxu0 0
        %721 = vmatpush1.bf16.msra.mxu0 0
        %722 = vmatprep.mubr.bf16.mxu0 0
        %723 = vmatmul.mubr.bf16.gmra.mrb[0].mxu0 %v401
        %v724 = vpop.f32.mrb[0].mxu0
        %v725 = vadd.f32 %v360, %v724
        %v726 = vpop.f32.mrb[0].mxu0
        %v727 = vadd.f32 %v364, %v726
        %v728 = vpop.f32.mrb[0].mxu0
        %v729 = vadd.f32 %v360, %v728
        %v730 = vpop.f32.mrb[0].mxu0
        %v731 = vadd.f32 %v364, %v730
        %732 = vmatprep.mubr.bf16.mxu0 0
        %733 = vmatmul.mubr.bf16.gmra.mrb[0].mxu0 %v402
        %v734 = vpop.f32.mrb[0].mxu0
        %v735 = vadd.f32 %v360, %v734
        %v736 = vpop.f32.mrb[0].mxu0
        %v737 = vadd.f32 %v364, %v736
        %v738 = vpop.f32.mrb[0].mxu0
        %v739 = vadd.f32 %v360, %v738
        %v740 = vpop.f32.mrb[0].mxu0
        %v741 = vadd.f32 %v364, %v740
        %742 = vmatprep.mubr.bf16.mxu0 0
        %743 = vmatmul.mubr.bf16.gmra.mrb[0].mxu0 %v403
        %v744 = vpop.f32.mrb[0].mxu0
        %v745 = vadd.f32 %v360, %v744
        %v746 = vpop.f32.mrb[0].mxu0
        %v747 = vadd.f32 %v364, %v746
        %v748 = vpop.f32.mrb[0].mxu0
        %v749 = vadd.f32 %v360, %v748
        %v750 = vpop.f32.mrb[0].mxu0
        %v751 = vadd.f32 %v364, %v750
        %752 = vmatprep.mubr.bf16.mxu0 0
        %753 = vmatmul.mubr.bf16.gmra.mrb[0].mxu0 %v404
        %v754 = vpop.f32.mrb[0].mxu0
        %v755 = vadd.f32 %v360, %v754
        %v756 = vpop.f32.mrb[0].mxu0
        %v757 = vadd.f32 %v364, %v756
        %v758 = vpop.f32.mrb[0].mxu0
        %v759 = vadd.f32 %v360, %v758
        %v760 = vpop.f32.mrb[0].mxu0
        %v761 = vadd.f32 %v364, %v760
        %762 = vmatprep.mubr.bf16.mxu0 0
        %763 = vmatmul.mubr.bf16.gmra.mrb[0].mxu0 %v405
        %v764 = vpop.f32.mrb[0].mxu0
        %v765 = vadd.f32 %v360, %v764
        %v766 = vpop.f32.mrb[0].mxu0
        %v767 = vadd.f32 %v364, %v766
        %v768 = vpop.f32.mrb[0].mxu0
        %v769 = vadd.f32 %v360, %v768
        %v770 = vpop.f32.mrb[0].mxu0
        %v771 = vadd.f32 %v364, %v770
        %772 = vmatprep.mubr.bf16.mxu0 0
        %773 = vmatmul.mubr.bf16.gmra.mrb[0].mxu0 %v406
        %v774 = vpop.f32.mrb[0].mxu0
        %v775 = vadd.f32 %v360, %v774
        %v776 = vpop.f32.mrb[0].mxu0
        %v777 = vadd.f32 %v364, %v776
        %v778 = vpop.f32.mrb[0].mxu0
        %v779 = vadd.f32 %v360, %v778
        %v780 = vpop.f32.mrb[0].mxu0
        %v781 = vadd.f32 %v364, %v780
        %782 = vmatprep.mubr.bf16.mxu0 0
        %783 = vmatmul.mubr.bf16.gmra.mrb[0].mxu0 %v407
        %v784 = vpop.f32.mrb[0].mxu0
        %v785 = vadd.f32 %v360, %v784
        %v786 = vpop.f32.mrb[0].mxu0
        %v787 = vadd.f32 %v364, %v786
        %v788 = vpop.f32.mrb[0].mxu0
        %v789 = vadd.f32 %v360, %v788
        %v790 = vpop.f32.mrb[0].mxu0
        %v791 = vadd.f32 %v364, %v790
        %792 = vmatprep.mubr.bf16.mxu0 0
        %793 = vmatmul.mubr.bf16.gmra.mrb[0].mxu0 %v408
        %v794 = vpop.f32.mrb[0].mxu0
        %v795 = vadd.f32 %v360, %v794
        %v796 = vpop.f32.mrb[0].mxu0
        %v797 = vadd.f32 %v364, %v796
        %v798 = vpop.f32.mrb[0].mxu0
        %v799 = vadd.f32 %v360, %v798
        %v800 = vpop.f32.mrb[0].mxu0
        %v801 = vadd.f32 %v364, %v800
        %802 = vdwg.mxu0
        %v803 = vld [vmem:[%s263] sm:$0xff]
        %v804 = vld [vmem:[%s263 + $0x8] sm:$0xff]
        %v805 = vld [vmem:[%s263 + $0x20] sm:$0xff]
        %v806 = vld [vmem:[%s263 + $0x28] sm:$0xff]
        %v807 = vld [vmem:[%s263 + $0x40] sm:$0xff]
        %v808 = vld [vmem:[%s263 + $0x48] sm:$0xff]
        %v809 = vld [vmem:[%s263 + $0x60] sm:$0xff]
        %v810 = vld [vmem:[%s263 + $0x68] sm:$0xff]
        %v811 = vld [vmem:[%s263 + $0x80] sm:$0xff]
        %v812 = vld [vmem:[%s263 + $0x88] sm:$0xff]
        %v813 = vld [vmem:[%s263 + $0xa0] sm:$0xff]
        %v814 = vld [vmem:[%s263 + $0xa8] sm:$0xff]
        %v815 = vld [vmem:[%s263 + $0xc0] sm:$0xff]
        %v816 = vld [vmem:[%s263 + $0xc8] sm:$0xff]
        %v817 = vld [vmem:[%s263 + $0xe0] sm:$0xff]
        %v818 = vld [vmem:[%s263 + $0xe8] sm:$0xff]
        %v819 = vunpack.c.l.bf16 %v803
        %v820 = vunpack.c.h.bf16 %v803
        %v821 = vunpack.c.l.bf16 %v804
        %v822 = vunpack.c.h.bf16 %v804
        %v823 = vunpack.c.l.bf16 %v805
        %v824 = vunpack.c.h.bf16 %v805
        %v825 = vunpack.c.l.bf16 %v806
        %v826 = vunpack.c.h.bf16 %v806
        %v827 = vunpack.c.l.bf16 %v807
        %v828 = vunpack.c.h.bf16 %v807
        %v829 = vunpack.c.l.bf16 %v808
        %v830 = vunpack.c.h.bf16 %v808
        %v831 = vunpack.c.l.bf16 %v809
        %v832 = vunpack.c.h.bf16 %v809
        %v833 = vunpack.c.l.bf16 %v810
        %v834 = vunpack.c.h.bf16 %v810
        %v835 = vunpack.c.l.bf16 %v811
        %v836 = vunpack.c.h.bf16 %v811
        %v837 = vunpack.c.l.bf16 %v812
        %v838 = vunpack.c.h.bf16 %v812
        %v839 = vunpack.c.l.bf16 %v813
        %v840 = vunpack.c.h.bf16 %v813
        %v841 = vunpack.c.l.bf16 %v814
        %v842 = vunpack.c.h.bf16 %v814
        %v843 = vunpack.c.l.bf16 %v815
        %v844 = vunpack.c.h.bf16 %v815
        %v845 = vunpack.c.l.bf16 %v816
        %v846 = vunpack.c.h.bf16 %v816
        %v847 = vunpack.c.l.bf16 %v817
        %v848 = vunpack.c.h.bf16 %v817
        %v849 = vunpack.c.l.bf16 %v818
        %v850 = vunpack.c.h.bf16 %v818
        %v851 = vmul.f32 %v612, %v819
        %v852 = vmul.f32 %v614, %v820
        %v853 = vmul.f32 %v616, %v821
        %v854 = vmul.f32 %v618, %v822
        %v855 = vmul.f32 %v622, %v823
        %v856 = vmul.f32 %v624, %v824
        %v857 = vmul.f32 %v626, %v825
        %v858 = vmul.f32 %v628, %v826
        %v859 = vmul.f32 %v632, %v827
        %v860 = vmul.f32 %v634, %v828
        %v861 = vmul.f32 %v636, %v829
        %v862 = vmul.f32 %v638, %v830
        %v863 = vmul.f32 %v642, %v831
        %v864 = vmul.f32 %v644, %v832
        %v865 = vmul.f32 %v646, %v833
        %v866 = vmul.f32 %v648, %v834
        %v867 = vmul.f32 %v652, %v835
        %v868 = vmul.f32 %v654, %v836
        %v869 = vmul.f32 %v656, %v837
        %v870 = vmul.f32 %v658, %v838
        %v871 = vmul.f32 %v662, %v839
        %v872 = vmul.f32 %v664, %v840
        %v873 = vmul.f32 %v666, %v841
        %v874 = vmul.f32 %v668, %v842
        %v875 = vmul.f32 %v672, %v843
        %v876 = vmul.f32 %v674, %v844
        %v877 = vmul.f32 %v676, %v845
        %v878 = vmul.f32 %v678, %v846
        %v879 = vmul.f32 %v682, %v847
        %v880 = vmul.f32 %v684, %v848
        %v881 = vmul.f32 %v686, %v849
        %v882 = vmul.f32 %v688, %v850
        %v883 = vmax.f32 %v851, 0.0
        %v884 = vmax.f32 %v852, 0.0
        %v885 = vmax.f32 %v853, 0.0
        %v886 = vmax.f32 %v854, 0.0
        %v887 = vmax.f32 %v855, 0.0
        %v888 = vmax.f32 %v856, 0.0
        %v889 = vmax.f32 %v857, 0.0
        %v890 = vmax.f32 %v858, 0.0
        %v891 = vmax.f32 %v859, 0.0
        %v892 = vmax.f32 %v860, 0.0
        %v893 = vmax.f32 %v861, 0.0
        %v894 = vmax.f32 %v862, 0.0
        %v895 = vmax.f32 %v863, 0.0
        %v896 = vmax.f32 %v864, 0.0
        %v897 = vmax.f32 %v865, 0.0
        %v898 = vmax.f32 %v866, 0.0
        %v899 = vmax.f32 %v867, 0.0
        %v900 = vmax.f32 %v868, 0.0
        %v901 = vmax.f32 %v869, 0.0
        %v902 = vmax.f32 %v870, 0.0
        %v903 = vmax.f32 %v871, 0.0
        %v904 = vmax.f32 %v872, 0.0
        %v905 = vmax.f32 %v873, 0.0
        %v906 = vmax.f32 %v874, 0.0
        %v907 = vmax.f32 %v875, 0.0
        %v908 = vmax.f32 %v876, 0.0
        %v909 = vmax.f32 %v877, 0.0
        %v910 = vmax.f32 %v878, 0.0
        %v911 = vmax.f32 %v879, 0.0
        %v912 = vmax.f32 %v880, 0.0
        %v913 = vmax.f32 %v881, 0.0
        %v914 = vmax.f32 %v882, 0.0
        %v915 = vpack.c.bf16 %v885, %v883
        %v916 = vpack.c.bf16 %v886, %v884
        %v917 = vpack.c.bf16 %v889, %v887
        %v918 = vpack.c.bf16 %v890, %v888
        %v919 = vpack.c.bf16 %v893, %v891
        %v920 = vpack.c.bf16 %v894, %v892
        %v921 = vpack.c.bf16 %v897, %v895
        %v922 = vpack.c.bf16 %v898, %v896
        %v923 = vpack.c.bf16 %v901, %v899
        %v924 = vpack.c.bf16 %v902, %v900
        %v925 = vpack.c.bf16 %v905, %v903
        %v926 = vpack.c.bf16 %v906, %v904
        %v927 = vpack.c.bf16 %v909, %v907
        %v928 = vpack.c.bf16 %v910, %v908
        %v929 = vpack.c.bf16 %v913, %v911
        %v930 = vpack.c.bf16 %v914, %v912
        %v947 = vunpack.c.l.b16 %v915
        %v948 = vunpack.c.l.b16 %v916
        %v949 = vunpack.c.h.b16 %v915
        %v950 = vunpack.c.h.b16 %v916
        %v951 = vunpack.c.l.b16 %v917
        %v952 = vunpack.c.l.b16 %v918
        %v953 = vunpack.c.h.b16 %v917
        %v954 = vunpack.c.h.b16 %v918
        %v955 = vunpack.c.l.b16 %v919
        %v956 = vunpack.c.l.b16 %v920
        %v957 = vunpack.c.h.b16 %v919
        %v958 = vunpack.c.h.b16 %v920
        %v959 = vunpack.c.l.b16 %v921
        %v960 = vunpack.c.l.b16 %v922
        %v961 = vunpack.c.h.b16 %v921
        %v962 = vunpack.c.h.b16 %v922
        %v963 = vunpack.c.l.b16 %v923
        %v964 = vunpack.c.l.b16 %v924
        %v965 = vunpack.c.h.b16 %v923
        %v966 = vunpack.c.h.b16 %v924
        %v967 = vunpack.c.l.b16 %v925
        %v968 = vunpack.c.l.b16 %v926
        %v969 = vunpack.c.h.b16 %v925
        %v970 = vunpack.c.h.b16 %v926
        %v971 = vunpack.c.l.b16 %v927
        %v972 = vunpack.c.l.b16 %v928
        %v973 = vunpack.c.h.b16 %v927
        %v974 = vunpack.c.h.b16 %v928
        %v975 = vunpack.c.l.b16 %v929
        %v976 = vunpack.c.l.b16 %v930
        %v977 = vunpack.c.h.b16 %v929
        %v978 = vunpack.c.h.b16 %v930
        %v979 = vpack.c.b16 %v948, %v947
        %v980 = vpack.c.b16 %v950, %v949
        %v981 = vpack.c.b16 %v952, %v951
        %v982 = vpack.c.b16 %v954, %v953
        %v983 = vpack.c.b16 %v956, %v955
        %v984 = vpack.c.b16 %v958, %v957
        %v985 = vpack.c.b16 %v960, %v959
        %v986 = vpack.c.b16 %v962, %v961
        %v987 = vpack.c.b16 %v964, %v963
        %v988 = vpack.c.b16 %v966, %v965
        %v989 = vpack.c.b16 %v968, %v967
        %v990 = vpack.c.b16 %v970, %v969
        %v991 = vpack.c.b16 %v972, %v971
        %v992 = vpack.c.b16 %v974, %v973
        %v993 = vpack.c.b16 %v976, %v975
        %v994 = vpack.c.b16 %v978, %v977
        %1011 = vst [vmem:[%s292] sm:$0xff] %v979
        %1012 = vst [vmem:[%s292 + $0x8] sm:$0xff] %v980
        %1013 = vst [vmem:[%s292 + $0x20] sm:$0xff] %v981
        %1014 = vst [vmem:[%s292 + $0x28] sm:$0xff] %v982
        %1015 = vst [vmem:[%s292 + $0x40] sm:$0xff] %v983
        %1016 = vst [vmem:[%s292 + $0x48] sm:$0xff] %v984
        %1017 = vst [vmem:[%s292 + $0x60] sm:$0xff] %v985
        %1018 = vst [vmem:[%s292 + $0x68] sm:$0xff] %v986
        %1019 = vst [vmem:[%s292 + $0x80] sm:$0xff] %v987
        %1020 = vst [vmem:[%s292 + $0x88] sm:$0xff] %v988
        %1021 = vst [vmem:[%s292 + $0xa0] sm:$0xff] %v989
        %1022 = vst [vmem:[%s292 + $0xa8] sm:$0xff] %v990
        %1023 = vst [vmem:[%s292 + $0xc0] sm:$0xff] %v991
        %1024 = vst [vmem:[%s292 + $0xc8] sm:$0xff] %v992
        %1025 = vst [vmem:[%s292 + $0xe0] sm:$0xff] %v993
        %1026 = vst [vmem:[%s292 + $0xe8] sm:$0xff] %v994
        %s1027 = scalar_lea.vmem %s263, 16 [#allocation7]
        %v1028 = vld [vmem:[%s1027] sm:$0xff]
        %v1029 = vld [vmem:[%s1027 + $0x8] sm:$0xff]
        %v1030 = vld [vmem:[%s1027 + $0x20] sm:$0xff]
        %v1031 = vld [vmem:[%s1027 + $0x28] sm:$0xff]
        %v1032 = vld [vmem:[%s1027 + $0x40] sm:$0xff]
        %v1033 = vld [vmem:[%s1027 + $0x48] sm:$0xff]
        %v1034 = vld [vmem:[%s1027 + $0x60] sm:$0xff]
        %v1035 = vld [vmem:[%s1027 + $0x68] sm:$0xff]
        %v1036 = vld [vmem:[%s1027 + $0x80] sm:$0xff]
        %v1037 = vld [vmem:[%s1027 + $0x88] sm:$0xff]
        %v1038 = vld [vmem:[%s1027 + $0xa0] sm:$0xff]
        %v1039 = vld [vmem:[%s1027 + $0xa8] sm:$0xff]
        %v1040 = vld [vmem:[%s1027 + $0xc0] sm:$0xff]
        %v1041 = vld [vmem:[%s1027 + $0xc8] sm:$0xff]
        %v1042 = vld [vmem:[%s1027 + $0xe0] sm:$0xff]
        %v1043 = vld [vmem:[%s1027 + $0xe8] sm:$0xff]
        %v1044 = vunpack.c.l.bf16 %v1028
        %v1045 = vunpack.c.h.bf16 %v1028
        %v1046 = vunpack.c.l.bf16 %v1029
        %v1047 = vunpack.c.h.bf16 %v1029
        %v1048 = vunpack.c.l.bf16 %v1030
        %v1049 = vunpack.c.h.bf16 %v1030
        %v1050 = vunpack.c.l.bf16 %v1031
        %v1051 = vunpack.c.h.bf16 %v1031
        %v1052 = vunpack.c.l.bf16 %v1032
        %v1053 = vunpack.c.h.bf16 %v1032
        %v1054 = vunpack.c.l.bf16 %v1033
        %v1055 = vunpack.c.h.bf16 %v1033
        %v1056 = vunpack.c.l.bf16 %v1034
        %v1057 = vunpack.c.h.bf16 %v1034
        %v1058 = vunpack.c.l.bf16 %v1035
        %v1059 = vunpack.c.h.bf16 %v1035
        %v1060 = vunpack.c.l.bf16 %v1036
        %v1061 = vunpack.c.h.bf16 %v1036
        %v1062 = vunpack.c.l.bf16 %v1037
        %v1063 = vunpack.c.h.bf16 %v1037
        %v1064 = vunpack.c.l.bf16 %v1038
        %v1065 = vunpack.c.h.bf16 %v1038
        %v1066 = vunpack.c.l.bf16 %v1039
        %v1067 = vunpack.c.h.bf16 %v1039
        %v1068 = vunpack.c.l.bf16 %v1040
        %v1069 = vunpack.c.h.bf16 %v1040
        %v1070 = vunpack.c.l.bf16 %v1041
        %v1071 = vunpack.c.h.bf16 %v1041
        %v1072 = vunpack.c.l.bf16 %v1042
        %v1073 = vunpack.c.h.bf16 %v1042
        %v1074 = vunpack.c.l.bf16 %v1043
        %v1075 = vunpack.c.h.bf16 %v1043
        %v1076 = vmul.f32 %v725, %v1044
        %v1077 = vmul.f32 %v727, %v1045
        %v1078 = vmul.f32 %v729, %v1046
        %v1079 = vmul.f32 %v731, %v1047
        %v1080 = vmul.f32 %v735, %v1048
        %v1081 = vmul.f32 %v737, %v1049
        %v1082 = vmul.f32 %v739, %v1050
        %v1083 = vmul.f32 %v741, %v1051
        %v1084 = vmul.f32 %v745, %v1052
        %v1085 = vmul.f32 %v747, %v1053
        %v1086 = vmul.f32 %v749, %v1054
        %v1087 = vmul.f32 %v751, %v1055
        %v1088 = vmul.f32 %v755, %v1056
        %v1089 = vmul.f32 %v757, %v1057
        %v1090 = vmul.f32 %v759, %v1058
        %v1091 = vmul.f32 %v761, %v1059
        %v1092 = vmul.f32 %v765, %v1060
        %v1093 = vmul.f32 %v767, %v1061
        %v1094 = vmul.f32 %v769, %v1062
        %v1095 = vmul.f32 %v771, %v1063
        %v1096 = vmul.f32 %v775, %v1064
        %v1097 = vmul.f32 %v777, %v1065
        %v1098 = vmul.f32 %v779, %v1066
        %v1099 = vmul.f32 %v781, %v1067
        %v1100 = vmul.f32 %v785, %v1068
        %v1101 = vmul.f32 %v787, %v1069
        %v1102 = vmul.f32 %v789, %v1070
        %v1103 = vmul.f32 %v791, %v1071
        %v1104 = vmul.f32 %v795, %v1072
        %v1105 = vmul.f32 %v797, %v1073
        %v1106 = vmul.f32 %v799, %v1074
        %v1107 = vmul.f32 %v801, %v1075
        %v1108 = vmax.f32 %v1076, 0.0
        %v1109 = vmax.f32 %v1077, 0.0
        %v1110 = vmax.f32 %v1078, 0.0
        %v1111 = vmax.f32 %v1079, 0.0
        %v1112 = vmax.f32 %v1080, 0.0
        %v1113 = vmax.f32 %v1081, 0.0
        %v1114 = vmax.f32 %v1082, 0.0
        %v1115 = vmax.f32 %v1083, 0.0
        %v1116 = vmax.f32 %v1084, 0.0
        %v1117 = vmax.f32 %v1085, 0.0
        %v1118 = vmax.f32 %v1086, 0.0
        %v1119 = vmax.f32 %v1087, 0.0
        %v1120 = vmax.f32 %v1088, 0.0
        %v1121 = vmax.f32 %v1089, 0.0
        %v1122 = vmax.f32 %v1090, 0.0
        %v1123 = vmax.f32 %v1091, 0.0
        %v1124 = vmax.f32 %v1092, 0.0
        %v1125 = vmax.f32 %v1093, 0.0
        %v1126 = vmax.f32 %v1094, 0.0
        %v1127 = vmax.f32 %v1095, 0.0
        %v1128 = vmax.f32 %v1096, 0.0
        %v1129 = vmax.f32 %v1097, 0.0
        %v1130 = vmax.f32 %v1098, 0.0
        %v1131 = vmax.f32 %v1099, 0.0
        %v1132 = vmax.f32 %v1100, 0.0
        %v1133 = vmax.f32 %v1101, 0.0
        %v1134 = vmax.f32 %v1102, 0.0
        %v1135 = vmax.f32 %v1103, 0.0
        %v1136 = vmax.f32 %v1104, 0.0
        %v1137 = vmax.f32 %v1105, 0.0
        %v1138 = vmax.f32 %v1106, 0.0
        %v1139 = vmax.f32 %v1107, 0.0
        %v1140 = vpack.c.bf16 %v1110, %v1108
        %v1141 = vpack.c.bf16 %v1111, %v1109
        %v1142 = vpack.c.bf16 %v1114, %v1112
        %v1143 = vpack.c.bf16 %v1115, %v1113
        %v1144 = vpack.c.bf16 %v1118, %v1116
        %v1145 = vpack.c.bf16 %v1119, %v1117
        %v1146 = vpack.c.bf16 %v1122, %v1120
        %v1147 = vpack.c.bf16 %v1123, %v1121
        %v1148 = vpack.c.bf16 %v1126, %v1124
        %v1149 = vpack.c.bf16 %v1127, %v1125
        %v1150 = vpack.c.bf16 %v1130, %v1128
        %v1151 = vpack.c.bf16 %v1131, %v1129
        %v1152 = vpack.c.bf16 %v1134, %v1132
        %v1153 = vpack.c.bf16 %v1135, %v1133
        %v1154 = vpack.c.bf16 %v1138, %v1136
        %v1155 = vpack.c.bf16 %v1139, %v1137
        %v1172 = vunpack.c.l.b16 %v1140
        %v1173 = vunpack.c.l.b16 %v1141
        %v1174 = vunpack.c.h.b16 %v1140
        %v1175 = vunpack.c.h.b16 %v1141
        %v1176 = vunpack.c.l.b16 %v1142
        %v1177 = vunpack.c.l.b16 %v1143
        %v1178 = vunpack.c.h.b16 %v1142
        %v1179 = vunpack.c.h.b16 %v1143
        %v1180 = vunpack.c.l.b16 %v1144
        %v1181 = vunpack.c.l.b16 %v1145
        %v1182 = vunpack.c.h.b16 %v1144
        %v1183 = vunpack.c.h.b16 %v1145
        %v1184 = vunpack.c.l.b16 %v1146
        %v1185 = vunpack.c.l.b16 %v1147
        %v1186 = vunpack.c.h.b16 %v1146
        %v1187 = vunpack.c.h.b16 %v1147
        %v1188 = vunpack.c.l.b16 %v1148
        %v1189 = vunpack.c.l.b16 %v1149
        %v1190 = vunpack.c.h.b16 %v1148
        %v1191 = vunpack.c.h.b16 %v1149
        %v1192 = vunpack.c.l.b16 %v1150
        %v1193 = vunpack.c.l.b16 %v1151
        %v1194 = vunpack.c.h.b16 %v1150
        %v1195 = vunpack.c.h.b16 %v1151
        %v1196 = vunpack.c.l.b16 %v1152
        %v1197 = vunpack.c.l.b16 %v1153
        %v1198 = vunpack.c.h.b16 %v1152
        %v1199 = vunpack.c.h.b16 %v1153
        %v1200 = vunpack.c.l.b16 %v1154
        %v1201 = vunpack.c.l.b16 %v1155
        %v1202 = vunpack.c.h.b16 %v1154
        %v1203 = vunpack.c.h.b16 %v1155
        %v1204 = vpack.c.b16 %v1173, %v1172
        %v1205 = vpack.c.b16 %v1175, %v1174
        %v1206 = vpack.c.b16 %v1177, %v1176
        %v1207 = vpack.c.b16 %v1179, %v1178
        %v1208 = vpack.c.b16 %v1181, %v1180
        %v1209 = vpack.c.b16 %v1183, %v1182
        %v1210 = vpack.c.b16 %v1185, %v1184
        %v1211 = vpack.c.b16 %v1187, %v1186
        %v1212 = vpack.c.b16 %v1189, %v1188
        %v1213 = vpack.c.b16 %v1191, %v1190
        %v1214 = vpack.c.b16 %v1193, %v1192
        %v1215 = vpack.c.b16 %v1195, %v1194
        %v1216 = vpack.c.b16 %v1197, %v1196
        %v1217 = vpack.c.b16 %v1199, %v1198
        %v1218 = vpack.c.b16 %v1201, %v1200
        %v1219 = vpack.c.b16 %v1203, %v1202
        %s1236 = scalar_lea.vmem %s292, 16 [#allocation8]
        %1237 = vst [vmem:[%s1236] sm:$0xff] %v1204
        %1238 = vst [vmem:[%s1236 + $0x8] sm:$0xff] %v1205
        %1239 = vst [vmem:[%s1236 + $0x20] sm:$0xff] %v1206
        %1240 = vst [vmem:[%s1236 + $0x28] sm:$0xff] %v1207
        %1241 = vst [vmem:[%s1236 + $0x40] sm:$0xff] %v1208
        %1242 = vst [vmem:[%s1236 + $0x48] sm:$0xff] %v1209
        %1243 = vst [vmem:[%s1236 + $0x60] sm:$0xff] %v1210
        %1244 = vst [vmem:[%s1236 + $0x68] sm:$0xff] %v1211
        %1245 = vst [vmem:[%s1236 + $0x80] sm:$0xff] %v1212
        %1246 = vst [vmem:[%s1236 + $0x88] sm:$0xff] %v1213
        %1247 = vst [vmem:[%s1236 + $0xa0] sm:$0xff] %v1214
        %1248 = vst [vmem:[%s1236 + $0xa8] sm:$0xff] %v1215
        %1249 = vst [vmem:[%s1236 + $0xc0] sm:$0xff] %v1216
        %1250 = vst [vmem:[%s1236 + $0xc8] sm:$0xff] %v1217
        %1251 = vst [vmem:[%s1236 + $0xe0] sm:$0xff] %v1218
        %1252 = vst [vmem:[%s1236 + $0xe8] sm:$0xff] %v1219
        %s1253 = sand.u32 %s144, 1
        %s1254 = scalar_lea.sflag [#allocation4], %s1253
        %s1255 = sand.u32 %s144, 1
        %s1256 = smul.addr %s1255, 256
        %s1257 = scalar_lea.vmem [#allocation8], %s1256
        // Predicated region
        $region49: #{tpu_custom_call.1} parent=35 // pred_check
          %p1258 = pneg %p154
        $region50: #{tpu_custom_call.1} parent=35 // pred_check_branch
          %1260 = sbr.rel (%p1258) target = $region52
        $region51: #{tpu_custom_call.1} parent=35 // pred_region
          %s1261 = smul.u32 8, %s27
          %s1263 = ssub.s32 4096, 4096
          %1264 = vsyncadd %s1254, %s1263
          %s1265 = smul.addr %s1261, 8
          %s1266 = smul.addr %s26, 128
          %s1267 = sadd.s32 %s1265, %s1266
          %s1268 = smul.addr %s1267, 64
          %s1269 = scalar_lea.hbm %s4, %s1268
          %s1270 = sshll.u32 %s1257, 4
          %s1271 = int_to_ptr.vmem [resolvable:$true] %s1270
          %1276 = dma.vmem_to_hbm [thread:$0]  %s1271, 4096, %s1269, %s1254, 128, 128, 8
        $region52: #{tpu_custom_call.1} parent=35 // pred_fallthru
          _
      $region36: #{tpu_custom_call.1} parent=5 // pred_fallthru
        _
      %p1277 = scmp.le.s32.totalorder 2, %s17
      // Predicated region
      $region53: #{tpu_custom_call.1} parent=5 // pred_check
        %p1278 = pneg %p1277
      $region54: #{tpu_custom_call.1} parent=5 // pred_check_branch
        %1280 = sbr.rel (%p1278) target = $region56
      $region55: #{tpu_custom_call.1} parent=5 // pred_region
        %s1281 = ssub.s32 %s17, 2
        // Predicated region
        $region57: #{tpu_custom_call.1} parent=55 // pred_check
          %p1282 = pneg %p160
        $region58: #{tpu_custom_call.1} parent=55 // pred_check_branch
          %1284 = sbr.rel (%p1282) target = $region60
        $region59: #{tpu_custom_call.1} parent=55 // pred_region
          %s1285 = sand.u32 %s145, 1
          %s1286 = scalar_lea.sflag [#allocation4], %s1285
          %s1287 = sand.u32 %s145, 1
          %s1288 = smul.addr %s1287, 256
          %s1289 = scalar_lea.vmem [#allocation8], %s1288
          %1290 = dma.done %s1286, 4096
        $region60: #{tpu_custom_call.1} parent=55 // pred_fallthru
          _
      $region56: #{tpu_custom_call.1} parent=5 // pred_fallthru
        _
    $region6: #{tpu_custom_call.1} parent=1 // loop_footer
      %s21 = sadd.s32 1, %s17
    $region7: #{tpu_custom_call.1} parent=1 // loop_footer_branch
      %16 = sbr.rel target = $region3
    $region8: #{tpu_custom_call.1} parent=1 // loop_exit
      _
    %1291 = vsyncpa [#allocation3], 1
    %s1292 = scalar_lea.sflag [#allocation3], 1
    %1293 = vsyncpa %s1292, 1
    %1294 = vsyncpa [#allocation6], 1
    %1295 = vsyncpa [#allocation4], 1
    %s1296 = scalar_lea.sflag [#allocation4], 1
    %1297 = vsyncpa %s1296, 1

</llo_original>
